<compile_context>
chip_gen: v7x
topology: tpu7x:2x2x1
jax: 0.10.0
libtpu: 0.0.40
codegen_flags: <defaults>
</compile_context>

<pallas_src>
import jax
import jax.numpy as jnp
from jax.experimental import pallas as pl
from jax.experimental.pallas import tpu as pltpu


EPS = 0.0      # GINConv default eps (train_eps=False)
LANE = 128     # lane width: pad feature / hidden / class dims to this
TM = 128       # node-row tile (output rows per grid step)
TK = 128       # adjacency-column (source-node) reduction tile


def _round_up(v, m):
    return ((v + m - 1) // m) * m


def _pad2d(a, rows, cols):
    return jnp.pad(a, ((0, rows - a.shape[0]), (0, cols - a.shape[1])))


def gin_kernel(adj_ref, xk_ref, xi_ref, w1_ref, b1_ref, w2_ref, b2_ref,
               o_ref, acc_ref):
    k = pl.program_id(1)

    @pl.when(k == 0)
    def _():
        acc_ref[...] = jnp.zeros_like(acc_ref)

    # GIN sum aggregation: one (TM, TK) x (TK, Fp) partial product on the MXU,
    # bf16 operands, f32 accumulation in VMEM scratch.
    acc_ref[...] += jnp.dot(adj_ref[...], xk_ref[...],
                            preferred_element_type=jnp.float32)

    @pl.when(k == pl.num_programs(1) - 1)
    def _():
        # (1 + eps) * x + agg, in f32.
        h = (1.0 + EPS) * xi_ref[...] + acc_ref[...]
        # Inner MLP: lin1 -> relu -> (dropout p=0.5: identity in eval) -> lin2.
        h1 = jnp.dot(h.astype(jnp.bfloat16), w1_ref[...],
                     preferred_element_type=jnp.float32) + b1_ref[...]
        h1 = jnp.maximum(h1, 0.0)
        out = jnp.dot(h1.astype(jnp.bfloat16), w2_ref[...],
                      preferred_element_type=jnp.float32) + b2_ref[...]
        # Outer dropout p=0.7: identity in eval mode.
        o_ref[...] = out.astype(o_ref.dtype)


def gin_forward(x, edge_index, w1, b1, w2, b2, *, tm=TM, tk=TK):
    """x: [N, F] f32, edge_index: [2, E] int32 (row 0 = src, row 1 = dst)."""
    n, f = x.shape
    h_dim = w1.shape[1]
    c = w2.shape[1]

    np_ = _round_up(n, max(tm, tk))
    fp = _round_up(f, LANE)
    hp = _round_up(h_dim, LANE)
    cp = _round_up(c, LANE)

    # Glue: dense adjacency (scatter-add of edges), A[dst, src] += 1.
    # Edge counts are small integers -> exact in bf16.
    src, dst = edge_index[0], edge_index[1]
    adj_bf = (jnp.zeros((np_, np_), jnp.float32)
              .at[dst, src].add(1.0)
              .astype(jnp.bfloat16))

    x_f32 = _pad2d(x, np_, fp)                       # residual path, f32
    x_bf = x_f32.astype(jnp.bfloat16)                # matmul operand, bf16
    w1_p = _pad2d(w1, fp, hp).astype(jnp.bfloat16)
    w2_p = _pad2d(w2, hp, cp).astype(jnp.bfloat16)
    b1_p = _pad2d(b1, 1, hp)
    b2_p = _pad2d(b2, 1, cp)

    grid = (np_ // tm, np_ // tk)

    flops = 2 * np_ * np_ * fp + 2 * np_ * fp * hp + 2 * np_ * hp * cp
    bytes_accessed = (adj_bf.size * 2 + x_bf.size * 2 + x_f32.size * 4
                      + w1_p.size * 2 + w2_p.size * 2
                      + (b1_p.size + b2_p.size) * 4 + np_ * cp * 4)

    # Per-step VMEM footprint (x2 for double-buffered pipelining) + headroom.
    vmem_bytes = (2 * (tm * tk * 2 + tk * fp * 2 + tm * fp * 4 + tm * cp * 4)
                  + fp * hp * 2 + hp * cp * 2 + (hp + cp) * 4
                  + tm * fp * 4)
    vmem_limit = int(max(2 * vmem_bytes, 4 * 1024 * 1024))

    out = pl.pallas_call(
        gin_kernel,
        out_shape=jax.ShapeDtypeStruct((np_, cp), jnp.float32),
        grid_spec=pltpu.PrefetchScalarGridSpec(
            num_scalar_prefetch=0,
            grid=grid,
            in_specs=[
                pl.BlockSpec((tm, tk), lambda i, k: (i, k)),   # A tile   (bf16)
                pl.BlockSpec((tk, fp), lambda i, k: (k, 0)),   # x source (bf16)
                pl.BlockSpec((tm, fp), lambda i, k: (i, 0)),   # x rows   (f32)
                pl.BlockSpec((fp, hp), lambda i, k: (0, 0)),   # W1       (bf16)
                pl.BlockSpec((1, hp),  lambda i, k: (0, 0)),   # b1       (f32)
                pl.BlockSpec((hp, cp), lambda i, k: (0, 0)),   # W2       (bf16)
                pl.BlockSpec((1, cp),  lambda i, k: (0, 0)),   # b2       (f32)
            ],
            out_specs=pl.BlockSpec((tm, cp), lambda i, k: (i, 0)),
            scratch_shapes=[pltpu.VMEM((tm, fp), jnp.float32)],
        ),
        compiler_params=pltpu.CompilerParams(
            dimension_semantics=("parallel", "arbitrary"),
            vmem_limit_bytes=vmem_limit,
        ),
        cost_estimate=pl.CostEstimate(
            flops=int(flops), transcendentals=0,
            bytes_accessed=int(bytes_accessed)),
    )(adj_bf, x_bf, x_f32, w1_p, b1_p, w2_p, b2_p)

    return out[:n, :c]


def reference_forward(x, edge_index, w1, b1, w2, b2):
    """Pure-f32 reference matching the original module (eval mode)."""
    n = x.shape[0]
    src, dst = edge_index[0], edge_index[1]
    adj = jnp.zeros((n, n), jnp.float32).at[dst, src].add(1.0)
    h = (1.0 + EPS) * x + adj @ x
    h1 = jnp.maximum(h @ w1 + b1, 0.0)
    return h1 @ w2 + b2


def reference_forward_bf16(x, edge_index, w1, b1, w2, b2):
    """Reference with the same bf16-operand / f32-accumulate precision as the kernel."""
    n = x.shape[0]
    src, dst = edge_index[0], edge_index[1]
    adj = jnp.zeros((n, n), jnp.float32).at[dst, src].add(1.0).astype(jnp.bfloat16)
    agg = jnp.dot(adj, x.astype(jnp.bfloat16), preferred_element_type=jnp.float32)
    h = (1.0 + EPS) * x + agg
    h1 = jnp.maximum(
        jnp.dot(h.astype(jnp.bfloat16), w1.astype(jnp.bfloat16),
                preferred_element_type=jnp.float32) + b1, 0.0)
    return jnp.dot(h1.astype(jnp.bfloat16), w2.astype(jnp.bfloat16),
                   preferred_element_type=jnp.float32) + b2


if __name__ == "__main__":
    # Small synthetic shapes consistent with the module's forward:
    #   N nodes, F input features, H hidden channels, C classes, E edges.
    N, F, H, C, E = 256, 48, 64, 8, 512

    key = jax.random.PRNGKey(0)
    kx, ke, kw1, kb1, kw2, kb2 = jax.random.split(key, 6)

    x = jax.random.normal(kx, (N, F), jnp.float32)
    edge_index = jax.random.randint(ke, (2, E), 0, N, jnp.int32)

    # Deterministic parameter init (Linear: weight [in, out], bias [1, out]).
    w1 = jax.random.normal(kw1, (F, H), jnp.float32) * (1.0 / jnp.sqrt(F))
    b1 = jax.random.normal(kb1, (1, H), jnp.float32) * 0.01
    w2 = jax.random.normal(kw2, (H, C), jnp.float32) * (1.0 / jnp.sqrt(H))
    b2 = jax.random.normal(kb2, (1, C), jnp.float32) * 0.01

    out = gin_forward(x, edge_index, w1, b1, w2, b2)
    jax.block_until_ready(out)
    assert out.shape == (N, C)

    # Tight check against a reference with matching bf16-operand / f32-acc precision.
    ref_bf16 = reference_forward_bf16(x, edge_index, w1, b1, w2, b2)
    assert jnp.allclose(out, ref_bf16, atol=1e-2, rtol=1e-2)

    # Looser sanity check against the pure-f32 reference (bf16 operand rounding).
    ref_f32 = reference_forward(x, edge_index, w1, b1, w2, b2)
    assert jnp.allclose(out, ref_f32, atol=1e-1, rtol=1e-1)

    print("KERNEL_OK")
</pallas_src>

<mosaic_0001>
module attributes {stable_mosaic.version = 11 : i64} {
  func.func @gin_kernel(%arg0: i32, %arg1: i32, %arg2: memref<128x128xbf16, #tpu.memory_space<vmem>>, %arg3: memref<128x128xbf16, #tpu.memory_space<vmem>>, %arg4: memref<128x128xf32, #tpu.memory_space<vmem>>, %arg5: memref<128x128xbf16, #tpu.memory_space<vmem>>, %arg6: memref<1x128xf32, #tpu.memory_space<vmem>>, %arg7: memref<128x128xbf16, #tpu.memory_space<vmem>>, %arg8: memref<1x128xf32, #tpu.memory_space<vmem>>, %arg9: memref<128x128xf32, #tpu.memory_space<vmem>>, %arg10: memref<128x128xf32, #tpu.memory_space<vmem>>) attributes {dimension_semantics = [#tpu.dimension_semantics<parallel>, #tpu.dimension_semantics<arbitrary>], iteration_bounds = array<i64: 2, 2>, scalar_prefetch = 0 : i64, scratch_operands = 1 : i64, tpu.core_type = #tpu.core_type<tc>, window_params = [{transform_indices = @transform_0, window_bounds = array<i64: 128, 128>}, {transform_indices = @transform_1, window_bounds = array<i64: 128, 128>}, {transform_indices = @transform_2, window_bounds = array<i64: 128, 128>}, {pipeline_mode = #tpu.pipeline_mode<synchronous>, transform_indices = @transform_3, window_bounds = array<i64: 128, 128>}, {pipeline_mode = #tpu.pipeline_mode<synchronous>, transform_indices = @transform_4, window_bounds = array<i64: 1, 128>}, {pipeline_mode = #tpu.pipeline_mode<synchronous>, transform_indices = @transform_5, window_bounds = array<i64: 128, 128>}, {pipeline_mode = #tpu.pipeline_mode<synchronous>, transform_indices = @transform_6, window_bounds = array<i64: 1, 128>}, {transform_indices = @transform_7, window_bounds = array<i64: 128, 128>}]} {
    %c0_i32 = arith.constant 0 : i32
    %0 = arith.cmpi eq, %arg1, %c0_i32 : i32
    %1 = arith.extui %0 : i1 to i32
    %c0_i32_0 = arith.constant 0 : i32
    %2 = arith.cmpi ne, %1, %c0_i32_0 : i32
    scf.if %2 {
      %cst_9 = arith.constant 0.000000e+00 : f32
      %12 = vector.broadcast %cst_9 : f32 to vector<128x128xf32>
      %c0_10 = arith.constant 0 : index
      %c0_11 = arith.constant 0 : index
      %13 = vector.load %arg10[%c0_10, %c0_11] : memref<128x128xf32, #tpu.memory_space<vmem>>, vector<128x128xf32>
      tpu.vector_store %arg10[%c0_10, %c0_11], %12 {strides = array<i32>} : memref<128x128xf32, #tpu.memory_space<vmem>>, vector<128x128xf32>,
    } else {
    }
    %c0 = arith.constant 0 : index
    %c0_1 = arith.constant 0 : index
    %3 = vector.load %arg10[%c0, %c0_1] : memref<128x128xf32, #tpu.memory_space<vmem>>, vector<128x128xf32>
    %c0_2 = arith.constant 0 : index
    %c0_3 = arith.constant 0 : index
    %4 = vector.load %arg2[%c0_2, %c0_3] : memref<128x128xbf16, #tpu.memory_space<vmem>>, vector<128x128xbf16>
    %c0_4 = arith.constant 0 : index
    %c0_5 = arith.constant 0 : index
    %5 = vector.load %arg3[%c0_4, %c0_5] : memref<128x128xbf16, #tpu.memory_space<vmem>>, vector<128x128xbf16>
    %cst = arith.constant dense<0.000000e+00> : vector<128x128xf32>
    %6 = tpu.matmul %4, %5, %cst {dimension_numbers = #tpu.dot_dimension_numbers<[1], [0], [0], [1], [0, 0, 1, 1], [], []>} : vector<128x128xbf16>, vector<128x128xbf16>, vector<128x128xf32> -> vector<128x128xf32>
    %7 = arith.addf %3, %6 : vector<128x128xf32>
    %c0_6 = arith.constant 0 : index
    %c0_7 = arith.constant 0 : index
    %8 = vector.load %arg10[%c0_6, %c0_7] : memref<128x128xf32, #tpu.memory_space<vmem>>, vector<128x128xf32>
    tpu.vector_store %arg10[%c0_6, %c0_7], %7 {strides = array<i32>} : memref<128x128xf32, #tpu.memory_space<vmem>>, vector<128x128xf32>,
    %c1_i32 = arith.constant 1 : i32
    %9 = arith.cmpi eq, %arg1, %c1_i32 : i32
    %10 = arith.extui %9 : i1 to i32
    %c0_i32_8 = arith.constant 0 : i32
    %11 = arith.cmpi ne, %10, %c0_i32_8 : i32
    scf.if %11 {
      %c0_9 = arith.constant 0 : index
      %c0_10 = arith.constant 0 : index
      %12 = vector.load %arg4[%c0_9, %c0_10] : memref<128x128xf32, #tpu.memory_space<vmem>>, vector<128x128xf32>
      %cst_11 = arith.constant 1.000000e+00 : f32
      %13 = vector.broadcast %cst_11 : f32 to vector<128x128xf32>
      %14 = arith.mulf %13, %12 : vector<128x128xf32>
      %c0_12 = arith.constant 0 : index
      %c0_13 = arith.constant 0 : index
      %15 = vector.load %arg10[%c0_12, %c0_13] : memref<128x128xf32, #tpu.memory_space<vmem>>, vector<128x128xf32>
      %16 = arith.addf %14, %15 : vector<128x128xf32>
      %17 = arith.truncf %16 : vector<128x128xf32> to vector<128x128xbf16>
      %c0_14 = arith.constant 0 : index
      %c0_15 = arith.constant 0 : index
      %18 = vector.load %arg5[%c0_14, %c0_15] : memref<128x128xbf16, #tpu.memory_space<vmem>>, vector<128x128xbf16>
      %cst_16 = arith.constant dense<0.000000e+00> : vector<128x128xf32>
      %19 = tpu.matmul %17, %18, %cst_16 {dimension_numbers = #tpu.dot_dimension_numbers<[1], [0], [0], [1], [0, 0, 1, 1], [], []>} : vector<128x128xbf16>, vector<128x128xbf16>, vector<128x128xf32> -> vector<128x128xf32>
      %c0_17 = arith.constant 0 : index
      %c0_18 = arith.constant 0 : index
      %20 = vector.load %arg6[%c0_17, %c0_18] : memref<1x128xf32, #tpu.memory_space<vmem>>, vector<1x128xf32>
      %21 = vector.broadcast %20 : vector<1x128xf32> to vector<128x128xf32>
      %22 = arith.addf %19, %21 : vector<128x128xf32>
      %cst_19 = arith.constant 0.000000e+00 : f32
      %23 = vector.broadcast %cst_19 : f32 to vector<128x128xf32>
      %24 = arith.maximumf %22, %23 : vector<128x128xf32>
      %25 = arith.truncf %24 : vector<128x128xf32> to vector<128x128xbf16>
      %c0_20 = arith.constant 0 : index
      %c0_21 = arith.constant 0 : index
      %26 = vector.load %arg7[%c0_20, %c0_21] : memref<128x128xbf16, #tpu.memory_space<vmem>>, vector<128x128xbf16>
      %cst_22 = arith.constant dense<0.000000e+00> : vector<128x128xf32>
      %27 = tpu.matmul %25, %26, %cst_22 {dimension_numbers = #tpu.dot_dimension_numbers<[1], [0], [0], [1], [0, 0, 1, 1], [], []>} : vector<128x128xbf16>, vector<128x128xbf16>, vector<128x128xf32> -> vector<128x128xf32>
      %c0_23 = arith.constant 0 : index
      %c0_24 = arith.constant 0 : index
      %28 = vector.load %arg8[%c0_23, %c0_24] : memref<1x128xf32, #tpu.memory_space<vmem>>, vector<1x128xf32>
      %29 = vector.broadcast %28 : vector<1x128xf32> to vector<128x128xf32>
      %30 = arith.addf %27, %29 : vector<128x128xf32>
      %c0_25 = arith.constant 0 : index
      %c0_26 = arith.constant 0 : index
      %31 = vector.load %arg9[%c0_25, %c0_26] : memref<128x128xf32, #tpu.memory_space<vmem>>, vector<128x128xf32>
      tpu.vector_store %arg9[%c0_25, %c0_26], %30 {strides = array<i32>} : memref<128x128xf32, #tpu.memory_space<vmem>>, vector<128x128xf32>,
    } else {
    }
    return
  }
  func.func @transform_0(%arg0: i32, %arg1: i32) -> (i32, i32) {
    %c0_i32 = arith.constant 0 : i32
    return %arg0, %arg1 : i32, i32
  }
  func.func @transform_1(%arg0: i32, %arg1: i32) -> (i32, i32) {
    %c0_i32 = arith.constant 0 : i32
    %c0_i32_0 = arith.constant 0 : i32
    return %arg1, %c0_i32 : i32, i32
  }
  func.func @transform_2(%arg0: i32, %arg1: i32) -> (i32, i32) {
    %c0_i32 = arith.constant 0 : i32
    %c0_i32_0 = arith.constant 0 : i32
    return %arg0, %c0_i32 : i32, i32
  }
  func.func @transform_3(%arg0: i32, %arg1: i32) -> (i32, i32) {
    %c0_i32 = arith.constant 0 : i32
    %c0_i32_0 = arith.constant 0 : i32
    %c0_i32_1 = arith.constant 0 : i32
    return %c0_i32, %c0_i32_0 : i32, i32
  }
  func.func @transform_4(%arg0: i32, %arg1: i32) -> (i32, i32) {
    %c0_i32 = arith.constant 0 : i32
    %c0_i32_0 = arith.constant 0 : i32
    %c0_i32_1 = arith.constant 0 : i32
    return %c0_i32, %c0_i32_0 : i32, i32
  }
  func.func @transform_5(%arg0: i32, %arg1: i32) -> (i32, i32) {
    %c0_i32 = arith.constant 0 : i32
    %c0_i32_0 = arith.constant 0 : i32
    %c0_i32_1 = arith.constant 0 : i32
    return %c0_i32, %c0_i32_0 : i32, i32
  }
  func.func @transform_6(%arg0: i32, %arg1: i32) -> (i32, i32) {
    %c0_i32 = arith.constant 0 : i32
    %c0_i32_0 = arith.constant 0 : i32
    %c0_i32_1 = arith.constant 0 : i32
    return %c0_i32, %c0_i32_0 : i32, i32
  }
  func.func @transform_7(%arg0: i32, %arg1: i32) -> (i32, i32) {
    %c0_i32 = arith.constant 0 : i32
    %c0_i32_0 = arith.constant 0 : i32
    return %arg0, %c0_i32 : i32, i32
  }
}

</mosaic_0001>

<llo_original>
// kernel: tpu_custom_call.1
$region0: #{tpu_custom_call.1}
  #allocation0 [shape = 'u32[]', space=smem, size = 0x4, offset = 0x4, fixed_abs, tag = 'smem constant byte address 0x4 - core index']
  #allocation1 [shape = 'u32[144,128]{1,0:T(1,128)}', space=vmem, size = 0x12000, scoped, tag = 'internal scratch']
  #allocation2 [shape = 'f32[128,128]{1,0:T(8,128)}', space=vmem, size = 0x10000, scoped, tag = 'scratch operand']
  %s0 = inlined_call_operand.hbm [shape: bf16[256,256], index: 0, kind: input, shape index: {}]
  %s1 = inlined_call_operand.hbm [shape: bf16[256,128], index: 1, kind: input, shape index: {}]
  %s2 = inlined_call_operand.hbm [shape: f32[256,128], index: 2, kind: input, shape index: {}]
  %s3 = inlined_call_operand.hbm [shape: bf16[128,128], index: 3, kind: input, shape index: {}]
  %s4 = inlined_call_operand.vmem [shape: f32[1,128], index: 4, kind: input, shape index: {}]
  %s5 = inlined_call_operand.hbm [shape: bf16[128,128], index: 5, kind: input, shape index: {}]
  %s6 = inlined_call_operand.vmem [shape: f32[1,128], index: 6, kind: input, shape index: {}]
  %s7 = inlined_call_operand.hbm [shape: f32[256,128], index: 7, kind: output, shape index: {}]
  %s8 = sld [smem:[#allocation0]]
  $region89: #{tpu_custom_call.1} parent=0
    _
  %s10 = ssub.s32 1, %s8
  %s11 = scalar_select 0, %s10, %s8
  $region1: #{tpu_custom_call.1} parent=0
    #allocation3 [shape = 'u8[65536]{0}', space=vmem, size = 0x10000, scoped, tag = 'input window, operand 0']
    #allocation4 [shape = 's32[2]{0}', space=sflag, size = 0x8, scoped, tag = 'scoped memory for tpu_custom_call.1']
    #allocation5 [shape = 's32[2]{0}', space=sflag, size = 0x8, scoped, tag = 'scoped memory for tpu_custom_call.1']
    #allocation6 [shape = 'u8[65536]{0}', space=vmem, size = 0x10000, scoped, tag = 'input window, operand 1']
    #allocation7 [shape = 's32[2]{0}', space=sflag, size = 0x8, scoped, tag = 'scoped memory for tpu_custom_call.1']
    #allocation8 [shape = 'u8[131072]{0}', space=vmem, size = 0x20000, scoped, tag = 'input window, operand 2']
    #allocation9 [shape = 'u8[32768]{0}', space=vmem, size = 0x8000, scoped, tag = 'input window, operand 3, single buffered']
    #allocation10 [shape = 's32[1]{0}', space=sflag, size = 0x4, scoped, tag = 'scoped memory for tpu_custom_call.1']
    #allocation11 [shape = 'u8[32768]{0}', space=vmem, size = 0x8000, scoped, tag = 'input window, operand 5, single buffered']
    #allocation12 [shape = 'u8[131072]{0}', space=vmem, size = 0x20000, scoped, tag = 'output window, operand 0']
    %12 = vsyncpa [#allocation4], 0
    %s13 = scalar_lea.sflag [#allocation4], 1
    %14 = vsyncpa %s13, 0
    %15 = vsyncpa [#allocation7], 0
    %s16 = scalar_lea.sflag [#allocation7], 1
    %17 = vsyncpa %s16, 0
    %18 = vsyncpa [#allocation10], 0
    %19 = vsyncpa [#allocation5], 0
    %s20 = scalar_lea.sflag [#allocation5], 1
    %21 = vsyncpa %s20, 0
    loop: start=0, step=1, limit=6
    $region2: #{tpu_custom_call.1} parent=1 // loop_pre_header
      _
    $region3: #{tpu_custom_call.1} parent=1 // loop_header
      %s23 = sphi 0, %s27
      %p24 = scmp.ge.s32.totalorder %s23, 6
      %s30 = sphi 0, %s42
      %s31 = sphi 0, %s38
      %s32 = sphi 0, %s30
      %s33 = sphi 0, %s31
      %s34 = sphi 0, %s32
      %s35 = sphi 0, %s33
      %s47 = sphi 0, %s49
      %s50 = sphi 0, %s47
      %s51 = sphi 0, %s50
      %s67 = sphi 0, %s51
      %s73 = sphi 0, %s75
      %s76 = sphi 0, %s73
      %s77 = sphi 0, %s76
      %s93 = sphi 0, %s77
      %s99 = sphi 0, %s101
      %s102 = sphi 0, %s99
      %s103 = sphi 0, %s102
      %s119 = sphi 0, %s103
      %s123 = sphi 0, %s123
      %s125 = sphi 0, %s123
      %s126 = sphi 0, %s125
      %s140 = sphi 0, %s126
      %s144 = sphi 0, %s144
      %s146 = sphi 0, %s144
      %s147 = sphi 0, %s146
      %s161 = sphi 0, %s147
      %s165 = sphi 0, %s165
      %s167 = sphi 0, %s165
      %s168 = sphi 0, %s167
      %s182 = sphi 0, %s168
      %s186 = sphi 0, %s186
      %s188 = sphi 0, %s186
      %s189 = sphi 0, %s188
      %s203 = sphi 0, %s189
      %s209 = sphi 0, %s211
      %s212 = sphi 0, %s209
      %s213 = sphi 0, %s212
      %s229 = sphi 0, %s213
    $region4: #{tpu_custom_call.1} parent=1 // loop_header_branch
      %26 = sbr.rel (%p24) target = $region8
    $region5: #{tpu_custom_call.1} parent=1 // loop_body
      %s28 = ssub.s32 %s23, 1
      %s29 = ssub.s32 %s23, 2
      %s36 = sadd.s32 1, %s31
      %p37 = scmp.ge.s32.totalorder %s36, 2
      %s38 = scalar_select %p37, 0, %s36
      %s39 = sadd.s32 1, %s30
      %s40 = scalar_select %p37, %s39, %s30
      %p41 = scmp.ge.s32.totalorder %s40, 2
      %s42 = scalar_select %p41, 0, %s40
      %s43 = ssub.s32 %s30, %s42
      %s44 = ssub.s32 %s31, %s38
      %s45 = sor.u32 %s43, %s44
      %p46 = scmp.eq.s32.totalorder %s45, 0
      %s48 = sadd.s32 %s47, 1
      %s49 = scalar_select %p46, %s47, %s48
      %p52 = pneg %p46
      %p53 = scmp.eq.s32.totalorder %s23, 3
      %p54 = por %p52, %p53
      %p55 = scmp.ne.s32.totalorder %s47, %s50
      %p56 = scmp.eq.s32.totalorder %s23, 0
      %p57 = por %p55, %p56
      %p58 = scmp.ne.s32.totalorder %s47, %s50
      %p59 = scmp.eq.s32.totalorder %s28, 3
      %p60 = por %p58, %p59
      %p61 = scmp.ne.s32.totalorder %s50, %s51
      %p62 = scmp.eq.s32.totalorder %s28, 0
      %p63 = por %p61, %p62
      %p64 = scmp.ne.s32.totalorder %s50, %s51
      %p65 = scmp.eq.s32.totalorder %s29, 3
      %p66 = por %p64, %p65
      %p68 = scmp.ne.s32.totalorder %s51, %s67
      %p69 = scmp.eq.s32.totalorder %s29, 0
      %p70 = por %p68, %p69
      %s71 = ssub.s32 %s31, %s38
      %p72 = scmp.eq.s32.totalorder %s71, 0
      %s74 = sadd.s32 %s73, 1
      %s75 = scalar_select %p72, %s73, %s74
      %p78 = pneg %p72
      %p79 = scmp.eq.s32.totalorder %s23, 3
      %p80 = por %p78, %p79
      %p81 = scmp.ne.s32.totalorder %s73, %s76
      %p82 = scmp.eq.s32.totalorder %s23, 0
      %p83 = por %p81, %p82
      %p84 = scmp.ne.s32.totalorder %s73, %s76
      %p85 = scmp.eq.s32.totalorder %s28, 3
      %p86 = por %p84, %p85
      %p87 = scmp.ne.s32.totalorder %s76, %s77
      %p88 = scmp.eq.s32.totalorder %s28, 0
      %p89 = por %p87, %p88
      %p90 = scmp.ne.s32.totalorder %s76, %s77
      %p91 = scmp.eq.s32.totalorder %s29, 3
      %p92 = por %p90, %p91
      %p94 = scmp.ne.s32.totalorder %s77, %s93
      %p95 = scmp.eq.s32.totalorder %s29, 0
      %p96 = por %p94, %p95
      %s97 = ssub.s32 %s30, %s42
      %p98 = scmp.eq.s32.totalorder %s97, 0
      %s100 = sadd.s32 %s99, 1
      %s101 = scalar_select %p98, %s99, %s100
      %p104 = pneg %p98
      %p105 = scmp.eq.s32.totalorder %s23, 3
      %p106 = por %p104, %p105
      %p107 = scmp.ne.s32.totalorder %s99, %s102
      %p108 = scmp.eq.s32.totalorder %s23, 0
      %p109 = por %p107, %p108
      %p110 = scmp.ne.s32.totalorder %s99, %s102
      %p111 = scmp.eq.s32.totalorder %s28, 3
      %p112 = por %p110, %p111
      %p113 = scmp.ne.s32.totalorder %s102, %s103
      %p114 = scmp.eq.s32.totalorder %s28, 0
      %p115 = por %p113, %p114
      %p116 = scmp.ne.s32.totalorder %s102, %s103
      %p117 = scmp.eq.s32.totalorder %s29, 3
      %p118 = por %p116, %p117
      %p120 = scmp.ne.s32.totalorder %s103, %s119
      %p121 = scmp.eq.s32.totalorder %s29, 0
      %p122 = por %p120, %p121
      %s124 = sadd.s32 %s123, 1
      %p127 = scmp.eq.s32.totalorder %s23, 3
      %p128 = scmp.ne.s32.totalorder %s123, %s125
      %p129 = scmp.eq.s32.totalorder %s23, 0
      %p130 = por %p128, %p129
      %p131 = scmp.ne.s32.totalorder %s123, %s125
      %p132 = scmp.eq.s32.totalorder %s28, 3
      %p133 = por %p131, %p132
      %p134 = scmp.ne.s32.totalorder %s125, %s126
      %p135 = scmp.eq.s32.totalorder %s28, 0
      %p136 = por %p134, %p135
      %p137 = scmp.ne.s32.totalorder %s125, %s126
      %p138 = scmp.eq.s32.totalorder %s29, 3
      %p139 = por %p137, %p138
      %p141 = scmp.ne.s32.totalorder %s126, %s140
      %p142 = scmp.eq.s32.totalorder %s29, 0
      %p143 = por %p141, %p142
      %s145 = sadd.s32 %s144, 1
      %p148 = scmp.eq.s32.totalorder %s23, 3
      %p149 = scmp.ne.s32.totalorder %s144, %s146
      %p150 = scmp.eq.s32.totalorder %s23, 0
      %p151 = por %p149, %p150
      %p152 = scmp.ne.s32.totalorder %s144, %s146
      %p153 = scmp.eq.s32.totalorder %s28, 3
      %p154 = por %p152, %p153
      %p155 = scmp.ne.s32.totalorder %s146, %s147
      %p156 = scmp.eq.s32.totalorder %s28, 0
      %p157 = por %p155, %p156
      %p158 = scmp.ne.s32.totalorder %s146, %s147
      %p159 = scmp.eq.s32.totalorder %s29, 3
      %p160 = por %p158, %p159
      %p162 = scmp.ne.s32.totalorder %s147, %s161
      %p163 = scmp.eq.s32.totalorder %s29, 0
      %p164 = por %p162, %p163
      %s166 = sadd.s32 %s165, 1
      %p169 = scmp.eq.s32.totalorder %s23, 3
      %p170 = scmp.ne.s32.totalorder %s165, %s167
      %p171 = scmp.eq.s32.totalorder %s23, 0
      %p172 = por %p170, %p171
      %p173 = scmp.ne.s32.totalorder %s165, %s167
      %p174 = scmp.eq.s32.totalorder %s28, 3
      %p175 = por %p173, %p174
      %p176 = scmp.ne.s32.totalorder %s167, %s168
      %p177 = scmp.eq.s32.totalorder %s28, 0
      %p178 = por %p176, %p177
      %p179 = scmp.ne.s32.totalorder %s167, %s168
      %p180 = scmp.eq.s32.totalorder %s29, 3
      %p181 = por %p179, %p180
      %p183 = scmp.ne.s32.totalorder %s168, %s182
      %p184 = scmp.eq.s32.totalorder %s29, 0
      %p185 = por %p183, %p184
      %s187 = sadd.s32 %s186, 1
      %p190 = scmp.eq.s32.totalorder %s23, 3
      %p191 = scmp.ne.s32.totalorder %s186, %s188
      %p192 = scmp.eq.s32.totalorder %s23, 0
      %p193 = por %p191, %p192
      %p194 = scmp.ne.s32.totalorder %s186, %s188
      %p195 = scmp.eq.s32.totalorder %s28, 3
      %p196 = por %p194, %p195
      %p197 = scmp.ne.s32.totalorder %s188, %s189
      %p198 = scmp.eq.s32.totalorder %s28, 0
      %p199 = por %p197, %p198
      %p200 = scmp.ne.s32.totalorder %s188, %s189
      %p201 = scmp.eq.s32.totalorder %s29, 3
      %p202 = por %p200, %p201
      %p204 = scmp.ne.s32.totalorder %s189, %s203
      %p205 = scmp.eq.s32.totalorder %s29, 0
      %p206 = por %p204, %p205
      %s207 = ssub.s32 %s30, %s42
      %p208 = scmp.eq.s32.totalorder %s207, 0
      %s210 = sadd.s32 %s209, 1
      %s211 = scalar_select %p208, %s209, %s210
      %p214 = pneg %p208
      %p215 = scmp.eq.s32.totalorder %s23, 3
      %p216 = por %p214, %p215
      %p217 = scmp.ne.s32.totalorder %s209, %s212
      %p218 = scmp.eq.s32.totalorder %s23, 0
      %p219 = por %p217, %p218
      %p220 = scmp.ne.s32.totalorder %s209, %s212
      %p221 = scmp.eq.s32.totalorder %s28, 3
      %p222 = por %p220, %p221
      %p223 = scmp.ne.s32.totalorder %s212, %s213
      %p224 = scmp.eq.s32.totalorder %s28, 0
      %p225 = por %p223, %p224
      %p226 = scmp.ne.s32.totalorder %s212, %s213
      %p227 = scmp.eq.s32.totalorder %s29, 3
      %p228 = por %p226, %p227
      %p230 = scmp.ne.s32.totalorder %s213, %s229
      %p231 = scmp.eq.s32.totalorder %s29, 0
      %p232 = por %p230, %p231
      %p233 = scmp.le.s32.totalorder 1, %s23
      %p234 = scmp.lt.s32.totalorder %s23, 5
      %p235 = pnand %p233, %p234
      %p236 = pneg %p235
      // Predicated region
      $region9: #{tpu_custom_call.1} parent=5 // pred_check
        _
      $region10: #{tpu_custom_call.1} parent=5 // pred_check_branch
        %238 = sbr.rel (%p235) target = $region12
      $region11: #{tpu_custom_call.1} parent=5 // pred_region
        %s239 = ssub.s32 %s23, 1
        // Predicated region
        $region13: #{tpu_custom_call.1} parent=11 // pred_check
          %p240 = pneg %p136
        $region14: #{tpu_custom_call.1} parent=11 // pred_check_branch
          %242 = sbr.rel (%p240) target = $region16
        $region15: #{tpu_custom_call.1} parent=11 // pred_region
          %s244 = ssub.s32 1024, 1024
          %245 = vsyncadd [#allocation10], %s244
          %s246 = sshll.u32 [#allocation9], 4
          %s247 = int_to_ptr.vmem [resolvable:$true] %s246
          %252 = dma.hbm_to_vmem [thread:$0]  %s3, 1024, %s247, [#allocation10], 64, 64, 4
        $region16: #{tpu_custom_call.1} parent=11 // pred_fallthru
          _
        // Predicated region
        $region17: #{tpu_custom_call.1} parent=11 // pred_check
          %p253 = pneg %p157
        $region18: #{tpu_custom_call.1} parent=11 // pred_check_branch
          %255 = sbr.rel (%p253) target = $region20
        $region19: #{tpu_custom_call.1} parent=11 // pred_region
          _
        $region20: #{tpu_custom_call.1} parent=11 // pred_fallthru
          _
        // Predicated region
        $region21: #{tpu_custom_call.1} parent=11 // pred_check
          %p256 = pneg %p178
        $region22: #{tpu_custom_call.1} parent=11 // pred_check_branch
          %258 = sbr.rel (%p256) target = $region24
        $region23: #{tpu_custom_call.1} parent=11 // pred_region
          %s260 = ssub.s32 1024, 1024
          %261 = vsyncadd [#allocation10], %s260
          %s262 = sshll.u32 [#allocation11], 4
          %s263 = int_to_ptr.vmem [resolvable:$true] %s262
          %268 = dma.hbm_to_vmem [thread:$0]  %s5, 1024, %s263, [#allocation10], 64, 64, 4
        $region24: #{tpu_custom_call.1} parent=11 // pred_fallthru
          _
        // Predicated region
        $region25: #{tpu_custom_call.1} parent=11 // pred_check
          %p269 = pneg %p199
        $region26: #{tpu_custom_call.1} parent=11 // pred_check_branch
          %271 = sbr.rel (%p269) target = $region28
        $region27: #{tpu_custom_call.1} parent=11 // pred_region
          _
        $region28: #{tpu_custom_call.1} parent=11 // pred_fallthru
          _
      $region12: #{tpu_custom_call.1} parent=5 // pred_fallthru
        _
      %p272 = scmp.lt.s32.totalorder %s23, 4
      // Predicated region
      $region29: #{tpu_custom_call.1} parent=5 // pred_check
        %p273 = pneg %p272
      $region30: #{tpu_custom_call.1} parent=5 // pred_check_branch
        %275 = sbr.rel (%p273) target = $region32
      $region31: #{tpu_custom_call.1} parent=5 // pred_region
        // Predicated region
        $region33: #{tpu_custom_call.1} parent=31 // pred_check
          %p276 = pneg %p57
        $region34: #{tpu_custom_call.1} parent=31 // pred_check_branch
          %278 = sbr.rel (%p276) target = $region36
        $region35: #{tpu_custom_call.1} parent=31 // pred_region
          %s279 = sand.u32 %s47, 1
          %s280 = scalar_lea.sflag [#allocation4], %s279
          %s281 = sand.u32 %s47, 1
          %s282 = smul.addr %s281, 64
          %s283 = scalar_lea.vmem [#allocation3], %s282
          %s284 = smul.u32 16, %s30
          %s286 = ssub.s32 1024, 1024
          %287 = vsyncadd %s280, %s286
          %s288 = smul.addr %s284, 2
          %s289 = sadd.s32 %s31, %s288
          %s290 = smul.addr %s289, 64
          %s291 = scalar_lea.hbm %s0, %s290
          %s292 = sshll.u32 %s283, 4
          %s293 = int_to_ptr.vmem [resolvable:$true] %s292
          %298 = dma.hbm_to_vmem [thread:$0]  %s291, 1024, %s293, %s280, 128, 64, 4
        $region36: #{tpu_custom_call.1} parent=31 // pred_fallthru
          _
        // Predicated region
        $region37: #{tpu_custom_call.1} parent=31 // pred_check
          %p299 = pneg %p83
        $region38: #{tpu_custom_call.1} parent=31 // pred_check_branch
          %301 = sbr.rel (%p299) target = $region40
        $region39: #{tpu_custom_call.1} parent=31 // pred_region
          %s302 = sand.u32 %s23, 1
          %s303 = scalar_lea.sflag [#allocation7], %s302
          %s304 = sand.u32 %s73, 1
          %s305 = smul.addr %s304, 64
          %s306 = scalar_lea.vmem [#allocation6], %s305
          %s307 = smul.u32 16, %s31
          %s309 = ssub.s32 1024, 1024
          %310 = vsyncadd %s303, %s309
          %s311 = smul.addr %s307, 64
          %s312 = scalar_lea.hbm %s1, %s311
          %s313 = sshll.u32 %s306, 4
          %s314 = int_to_ptr.vmem [resolvable:$true] %s313
          %319 = dma.hbm_to_vmem [thread:$0]  %s312, 1024, %s314, %s303, 64, 64, 4
        $region40: #{tpu_custom_call.1} parent=31 // pred_fallthru
          _
        // Predicated region
        $region41: #{tpu_custom_call.1} parent=31 // pred_check
          %p320 = pneg %p109
        $region42: #{tpu_custom_call.1} parent=31 // pred_check_branch
          %322 = sbr.rel (%p320) target = $region44
        $region43: #{tpu_custom_call.1} parent=31 // pred_region
          %s323 = sand.u32 %s23, 1
          %s324 = scalar_lea.sflag [#allocation7], %s323
          %s325 = sand.u32 %s99, 1
          %s326 = smul.addr %s325, 128
          %s327 = scalar_lea.vmem [#allocation8], %s326
          %s328 = smul.u32 16, %s30
          %s330 = ssub.s32 2048, 2048
          %331 = vsyncadd %s324, %s330
          %s332 = smul.addr %s328, 128
          %s333 = scalar_lea.hbm %s2, %s332
          %s334 = sshll.u32 %s327, 4
          %s335 = int_to_ptr.vmem [resolvable:$true] %s334
          %340 = dma.hbm_to_vmem [thread:$0]  %s333, 2048, %s335, %s324, 128, 128, 8
        $region44: #{tpu_custom_call.1} parent=31 // pred_fallthru
          _
      $region32: #{tpu_custom_call.1} parent=5 // pred_fallthru
        _
      %p341 = scmp.le.s32.totalorder 1, %s23
      %p342 = scmp.lt.s32.totalorder %s23, 5
      %p343 = pnand %p341, %p342
      %p344 = pneg %p343
      // Predicated region
      $region45: #{tpu_custom_call.1} parent=5 // pred_check
        _
      $region46: #{tpu_custom_call.1} parent=5 // pred_check_branch
        %346 = sbr.rel (%p343) target = $region48
      $region47: #{tpu_custom_call.1} parent=5 // pred_region
        %s347 = ssub.s32 %s23, 1
        %s348 = sand.u32 %s50, 1
        %s349 = scalar_lea.sflag [#allocation4], %s348
        %s350 = sand.u32 %s50, 1
        %s351 = smul.addr %s350, 64
        %s352 = scalar_lea.vmem [#allocation3], %s351
        // Predicated region
        $region49: #{tpu_custom_call.1} parent=47 // pred_check
          %p353 = pneg %p63
        $region50: #{tpu_custom_call.1} parent=47 // pred_check_branch
          %355 = sbr.rel (%p353) target = $region52
        $region51: #{tpu_custom_call.1} parent=47 // pred_region
          %356 = dma.done %s349, 1024
        $region52: #{tpu_custom_call.1} parent=47 // pred_fallthru
          _
        %s357 = sand.u32 %s28, 1
        %s358 = scalar_lea.sflag [#allocation7], %s357
        %s359 = sand.u32 %s76, 1
        %s360 = smul.addr %s359, 64
        %s361 = scalar_lea.vmem [#allocation6], %s360
        // Predicated region
        $region53: #{tpu_custom_call.1} parent=47 // pred_check
          %p362 = pneg %p89
        $region54: #{tpu_custom_call.1} parent=47 // pred_check_branch
          %364 = sbr.rel (%p362) target = $region56
        $region55: #{tpu_custom_call.1} parent=47 // pred_region
          %365 = dma.done %s358, 1024
        $region56: #{tpu_custom_call.1} parent=47 // pred_fallthru
          _
        %s366 = sand.u32 %s28, 1
        %s367 = scalar_lea.sflag [#allocation7], %s366
        %s368 = sand.u32 %s102, 1
        %s369 = smul.addr %s368, 128
        %s370 = scalar_lea.vmem [#allocation8], %s369
        // Predicated region
        $region57: #{tpu_custom_call.1} parent=47 // pred_check
          %p371 = pneg %p115
        $region58: #{tpu_custom_call.1} parent=47 // pred_check_branch
          %373 = sbr.rel (%p371) target = $region60
        $region59: #{tpu_custom_call.1} parent=47 // pred_region
          %374 = dma.done %s367, 2048
        $region60: #{tpu_custom_call.1} parent=47 // pred_fallthru
          _
        // Predicated region
        $region61: #{tpu_custom_call.1} parent=47 // pred_check
          %p375 = pneg %p136
        $region62: #{tpu_custom_call.1} parent=47 // pred_check_branch
          %377 = sbr.rel (%p375) target = $region64
        $region63: #{tpu_custom_call.1} parent=47 // pred_region
          %378 = dma.done [#allocation10], 1024
        $region64: #{tpu_custom_call.1} parent=47 // pred_fallthru
          _
        // Predicated region
        $region65: #{tpu_custom_call.1} parent=47 // pred_check
          %p379 = pneg %p178
        $region66: #{tpu_custom_call.1} parent=47 // pred_check_branch
          %381 = sbr.rel (%p379) target = $region68
        $region67: #{tpu_custom_call.1} parent=47 // pred_region
          %382 = dma.done [#allocation10], 1024
        $region68: #{tpu_custom_call.1} parent=47 // pred_fallthru
          _
        %s383 = sand.u32 %s50, 1
        %s384 = scalar_lea.sflag [#allocation4], %s383
        %s385 = sand.u32 %s50, 1
        %s386 = smul.addr %s385, 64
        %s387 = scalar_lea.vmem [#allocation3], %s386
        %p388 = pneg %p63
        %p389 = pneg %p60
        %s390 = sand.u32 %s28, 1
        %s391 = scalar_lea.sflag [#allocation7], %s390
        %s392 = sand.u32 %s76, 1
        %s393 = smul.addr %s392, 64
        %s394 = scalar_lea.vmem [#allocation6], %s393
        %p395 = pneg %p89
        %p396 = pneg %p86
        %s397 = sand.u32 %s28, 1
        %s398 = scalar_lea.sflag [#allocation7], %s397
        %s399 = sand.u32 %s102, 1
        %s400 = smul.addr %s399, 128
        %s401 = scalar_lea.vmem [#allocation8], %s400
        %p402 = pneg %p115
        %p403 = pneg %p112
        %p404 = pneg %p136
        %p405 = pneg %p133
        %p406 = pneg %p157
        %p407 = pneg %p154
        %p408 = pneg %p178
        %p409 = pneg %p175
        %p410 = pneg %p199
        %p411 = pneg %p196
        %p412 = pneg %p225
        %p413 = pneg %p222
        %s414 = sand.u32 %s212, 1
        %s415 = scalar_lea.sflag [#allocation5], %s414
        %s416 = sand.u32 %s212, 1
        %s417 = smul.addr %s416, 128
        %s418 = scalar_lea.vmem [#allocation12], %s417
        %s419 = smul.u32 16, %s32
        %s420 = smul.u32 16, %s33
        %s421 = smul.u32 16, %s32
        %s422 = smul.u32 16, %s32
        %p424 = scmp.eq.s32.totalorder %s33, 0
        // Predicated region
        $region69: #{tpu_custom_call.1} parent=47 // pred_check
          %p425 = pneg %p424
        $region70: #{tpu_custom_call.1} parent=47 // pred_check_branch
          %427 = sbr.rel (%p425) target = $region72
        $region71: #{tpu_custom_call.1} parent=47 // pred_region
          %428 = vst [vmem:[#allocation2] sm:$0xff] 0.0
          %429 = vst [vmem:[#allocation2 + $0x8] sm:$0xff] 0.0
          %430 = vst [vmem:[#allocation2 + $0x10] sm:$0xff] 0.0
          %431 = vst [vmem:[#allocation2 + $0x18] sm:$0xff] 0.0
          %432 = vst [vmem:[#allocation2 + $0x20] sm:$0xff] 0.0
          %433 = vst [vmem:[#allocation2 + $0x28] sm:$0xff] 0.0
          %434 = vst [vmem:[#allocation2 + $0x30] sm:$0xff] 0.0
          %435 = vst [vmem:[#allocation2 + $0x38] sm:$0xff] 0.0
          %436 = vst [vmem:[#allocation2 + $0x40] sm:$0xff] 0.0
          %437 = vst [vmem:[#allocation2 + $0x48] sm:$0xff] 0.0
          %438 = vst [vmem:[#allocation2 + $0x50] sm:$0xff] 0.0
          %439 = vst [vmem:[#allocation2 + $0x58] sm:$0xff] 0.0
          %440 = vst [vmem:[#allocation2 + $0x60] sm:$0xff] 0.0
          %441 = vst [vmem:[#allocation2 + $0x68] sm:$0xff] 0.0
          %442 = vst [vmem:[#allocation2 + $0x70] sm:$0xff] 0.0
          %443 = vst [vmem:[#allocation2 + $0x78] sm:$0xff] 0.0
        $region72: #{tpu_custom_call.1} parent=47 // pred_fallthru
          _
        %v444 = vld [vmem:[#allocation2] sm:$0xff]
        %v445 = vld [vmem:[#allocation2 + $0x8] sm:$0xff]
        %v446 = vld [vmem:[#allocation2 + $0x10] sm:$0xff]
        %v447 = vld [vmem:[#allocation2 + $0x18] sm:$0xff]
        %v448 = vld [vmem:[#allocation2 + $0x20] sm:$0xff]
        %v449 = vld [vmem:[#allocation2 + $0x28] sm:$0xff]
        %v450 = vld [vmem:[#allocation2 + $0x30] sm:$0xff]
        %v451 = vld [vmem:[#allocation2 + $0x38] sm:$0xff]
        %v452 = vld [vmem:[#allocation2 + $0x40] sm:$0xff]
        %v453 = vld [vmem:[#allocation2 + $0x48] sm:$0xff]
        %v454 = vld [vmem:[#allocation2 + $0x50] sm:$0xff]
        %v455 = vld [vmem:[#allocation2 + $0x58] sm:$0xff]
        %v456 = vld [vmem:[#allocation2 + $0x60] sm:$0xff]
        %v457 = vld [vmem:[#allocation2 + $0x68] sm:$0xff]
        %v458 = vld [vmem:[#allocation2 + $0x70] sm:$0xff]
        %v459 = vld [vmem:[#allocation2 + $0x78] sm:$0xff]
        %v460 = vld [vmem:[%s352] sm:$0xf]
        %v461 = vld [vmem:[%s352 + $0x4] sm:$0xf]
        %v462 = vld [vmem:[%s352 + $0x8] sm:$0xf]
        %v463 = vld [vmem:[%s352 + $0xc] sm:$0xf]
        %v464 = vld [vmem:[%s352 + $0x10] sm:$0xf]
        %v465 = vld [vmem:[%s352 + $0x14] sm:$0xf]
        %v466 = vld [vmem:[%s352 + $0x18] sm:$0xf]
        %v467 = vld [vmem:[%s352 + $0x1c] sm:$0xf]
        %v468 = vld [vmem:[%s352 + $0x20] sm:$0xf]
        %v469 = vld [vmem:[%s352 + $0x24] sm:$0xf]
        %v470 = vld [vmem:[%s352 + $0x28] sm:$0xf]
        %v471 = vld [vmem:[%s352 + $0x2c] sm:$0xf]
        %v472 = vld [vmem:[%s352 + $0x30] sm:$0xf]
        %v473 = vld [vmem:[%s352 + $0x34] sm:$0xf]
        %v474 = vld [vmem:[%s352 + $0x38] sm:$0xf]
        %v475 = vld [vmem:[%s352 + $0x3c] sm:$0xf]
        %v476 = vld [vmem:[%s361] sm:$0xf]
        %v477 = vld [vmem:[%s361 + $0x4] sm:$0xf]
        %v478 = vld [vmem:[%s361 + $0x8] sm:$0xf]
        %v479 = vld [vmem:[%s361 + $0xc] sm:$0xf]
        %v480 = vld [vmem:[%s361 + $0x10] sm:$0xf]
        %v481 = vld [vmem:[%s361 + $0x14] sm:$0xf]
        %v482 = vld [vmem:[%s361 + $0x18] sm:$0xf]
        %v483 = vld [vmem:[%s361 + $0x1c] sm:$0xf]
        %v484 = vld [vmem:[%s361 + $0x20] sm:$0xf]
        %v485 = vld [vmem:[%s361 + $0x24] sm:$0xf]
        %v486 = vld [vmem:[%s361 + $0x28] sm:$0xf]
        %v487 = vld [vmem:[%s361 + $0x2c] sm:$0xf]
        %v488 = vld [vmem:[%s361 + $0x30] sm:$0xf]
        %v489 = vld [vmem:[%s361 + $0x34] sm:$0xf]
        %v490 = vld [vmem:[%s361 + $0x38] sm:$0xf]
        %v491 = vld [vmem:[%s361 + $0x3c] sm:$0xf]
        %v508 = vunpack.c.l.b16 %v460
        %v509 = vunpack.c.l.b16 %v461
        %v510 = vunpack.c.l.b16 %v462
        %v511 = vunpack.c.l.b16 %v463
        %v512 = vunpack.c.l.b16 %v464
        %v513 = vunpack.c.l.b16 %v465
        %v514 = vunpack.c.l.b16 %v466
        %v515 = vunpack.c.l.b16 %v467
        %v516 = vunpack.c.l.b16 %v468
        %v517 = vunpack.c.l.b16 %v469
        %v518 = vunpack.c.l.b16 %v470
        %v519 = vunpack.c.l.b16 %v471
        %v520 = vunpack.c.l.b16 %v472
        %v521 = vunpack.c.l.b16 %v473
        %v522 = vunpack.c.l.b16 %v474
        %v523 = vunpack.c.l.b16 %v475
        %v524 = vpack.c.b16 %v509, %v508
        %v525 = vpack.c.b16 %v511, %v510
        %v526 = vpack.c.b16 %v513, %v512
        %v527 = vpack.c.b16 %v515, %v514
        %v528 = vpack.c.b16 %v517, %v516
        %v529 = vpack.c.b16 %v519, %v518
        %v530 = vpack.c.b16 %v521, %v520
        %v531 = vpack.c.b16 %v523, %v522
        %v556 = vunpack.c.l.b16 %v476
        %v557 = vunpack.c.l.b16 %v477
        %v558 = vunpack.c.l.b16 %v478
        %v559 = vunpack.c.l.b16 %v479
        %v560 = vunpack.c.l.b16 %v480
        %v561 = vunpack.c.l.b16 %v481
        %v562 = vunpack.c.l.b16 %v482
        %v563 = vunpack.c.l.b16 %v483
        %v564 = vunpack.c.l.b16 %v484
        %v565 = vunpack.c.l.b16 %v485
        %v566 = vunpack.c.l.b16 %v486
        %v567 = vunpack.c.l.b16 %v487
        %v568 = vunpack.c.l.b16 %v488
        %v569 = vunpack.c.l.b16 %v489
        %v570 = vunpack.c.l.b16 %v490
        %v571 = vunpack.c.l.b16 %v491
        %v572 = vpack.c.b16 %v557, %v556
        %v573 = vpack.c.b16 %v559, %v558
        %v574 = vpack.c.b16 %v561, %v560
        %v575 = vpack.c.b16 %v563, %v562
        %v576 = vpack.c.b16 %v565, %v564
        %v577 = vpack.c.b16 %v567, %v566
        %v578 = vpack.c.b16 %v569, %v568
        %v579 = vpack.c.b16 %v571, %v570
        %588 = vmatprep.subr.bf16.mxu0 0
        %589 = vmatpush1.bf16.msra.mxu0 %v572
        %590 = vmatprep.subr.bf16.mxu0 0
        %591 = vmatpush1.bf16.msra.mxu0 %v573
        %592 = vmatprep.subr.bf16.mxu0 0
        %593 = vmatpush1.bf16.msra.mxu0 %v574
        %594 = vmatprep.subr.bf16.mxu0 0
        %595 = vmatpush1.bf16.msra.mxu0 %v575
        %596 = vmatprep.subr.bf16.mxu0 0
        %597 = vmatpush1.bf16.msra.mxu0 %v576
        %598 = vmatprep.subr.bf16.mxu0 0
        %599 = vmatpush1.bf16.msra.mxu0 %v577
        %600 = vmatprep.subr.bf16.mxu0 0
        %601 = vmatpush1.bf16.msra.mxu0 %v578
        %602 = vmatprep.subr.bf16.mxu0 0
        %603 = vmatpush1.bf16.msra.mxu0 %v579
        %604 = vmatprep.subr.bf16.mxu0 0
        %605 = vmatpush1.bf16.msra.mxu0 0
        %606 = vmatprep.subr.bf16.mxu0 0
        %607 = vmatpush1.bf16.msra.mxu0 0
        %608 = vmatprep.subr.bf16.mxu0 0
        %609 = vmatpush1.bf16.msra.mxu0 0
        %610 = vmatprep.subr.bf16.mxu0 0
        %611 = vmatpush1.bf16.msra.mxu0 0
        %612 = vmatprep.subr.bf16.mxu0 0
        %613 = vmatpush1.bf16.msra.mxu0 0
        %614 = vmatprep.subr.bf16.mxu0 0
        %615 = vmatpush1.bf16.msra.mxu0 0
        %616 = vmatprep.subr.bf16.mxu0 0
        %617 = vmatpush1.bf16.msra.mxu0 0
        %618 = vmatprep.subr.bf16.mxu0 0
        %619 = vmatpush1.bf16.msra.mxu0 0
        %620 = vmatprep.mubr.bf16.mxu0 0
        %621 = vmatmul.mubr.bf16.gmra.mrb[0].mxu0 %v524
        %v622 = vpop.f32.mrb[0].mxu0
        %v623 = vadd.f32 0.0, %v622
        %v624 = vpop.f32.mrb[0].mxu0
        %v625 = vpop.f32.mrb[0].mxu0
        %v626 = vadd.f32 0.0, %v625
        %v627 = vpop.f32.mrb[0].mxu0
        %628 = vmatprep.mubr.bf16.mxu0 0
        %629 = vmatmul.mubr.bf16.gmra.mrb[0].mxu0 %v525
        %v630 = vpop.f32.mrb[0].mxu0
        %v631 = vadd.f32 0.0, %v630
        %v632 = vpop.f32.mrb[0].mxu0
        %v633 = vpop.f32.mrb[0].mxu0
        %v634 = vadd.f32 0.0, %v633
        %v635 = vpop.f32.mrb[0].mxu0
        %636 = vmatprep.mubr.bf16.mxu0 0
        %637 = vmatmul.mubr.bf16.gmra.mrb[0].mxu0 %v526
        %v638 = vpop.f32.mrb[0].mxu0
        %v639 = vadd.f32 0.0, %v638
        %v640 = vpop.f32.mrb[0].mxu0
        %v641 = vpop.f32.mrb[0].mxu0
        %v642 = vadd.f32 0.0, %v641
        %v643 = vpop.f32.mrb[0].mxu0
        %644 = vmatprep.mubr.bf16.mxu0 0
        %645 = vmatmul.mubr.bf16.gmra.mrb[0].mxu0 %v527
        %v646 = vpop.f32.mrb[0].mxu0
        %v647 = vadd.f32 0.0, %v646
        %v648 = vpop.f32.mrb[0].mxu0
        %v649 = vpop.f32.mrb[0].mxu0
        %v650 = vadd.f32 0.0, %v649
        %v651 = vpop.f32.mrb[0].mxu0
        %652 = vmatprep.mubr.bf16.mxu0 0
        %653 = vmatmul.mubr.bf16.gmra.mrb[0].mxu0 %v528
        %v654 = vpop.f32.mrb[0].mxu0
        %v655 = vadd.f32 0.0, %v654
        %v656 = vpop.f32.mrb[0].mxu0
        %v657 = vpop.f32.mrb[0].mxu0
        %v658 = vadd.f32 0.0, %v657
        %v659 = vpop.f32.mrb[0].mxu0
        %660 = vmatprep.mubr.bf16.mxu0 0
        %661 = vmatmul.mubr.bf16.gmra.mrb[0].mxu0 %v529
        %v662 = vpop.f32.mrb[0].mxu0
        %v663 = vadd.f32 0.0, %v662
        %v664 = vpop.f32.mrb[0].mxu0
        %v665 = vpop.f32.mrb[0].mxu0
        %v666 = vadd.f32 0.0, %v665
        %v667 = vpop.f32.mrb[0].mxu0
        %668 = vmatprep.mubr.bf16.mxu0 0
        %669 = vmatmul.mubr.bf16.gmra.mrb[0].mxu0 %v530
        %v670 = vpop.f32.mrb[0].mxu0
        %v671 = vadd.f32 0.0, %v670
        %v672 = vpop.f32.mrb[0].mxu0
        %v673 = vpop.f32.mrb[0].mxu0
        %v674 = vadd.f32 0.0, %v673
        %v675 = vpop.f32.mrb[0].mxu0
        %676 = vmatprep.mubr.bf16.mxu0 0
        %677 = vmatmul.mubr.bf16.gmra.mrb[0].mxu0 %v531
        %v678 = vpop.f32.mrb[0].mxu0
        %v679 = vadd.f32 0.0, %v678
        %v680 = vpop.f32.mrb[0].mxu0
        %v681 = vpop.f32.mrb[0].mxu0
        %v682 = vadd.f32 0.0, %v681
        %v683 = vpop.f32.mrb[0].mxu0
        %684 = vdwg.mxu0
        %v685 = vadd.f32 %v444, %v623
        %v686 = vadd.f32 %v445, %v626
        %v687 = vadd.f32 %v446, %v631
        %v688 = vadd.f32 %v447, %v634
        %v689 = vadd.f32 %v448, %v639
        %v690 = vadd.f32 %v449, %v642
        %v691 = vadd.f32 %v450, %v647
        %v692 = vadd.f32 %v451, %v650
        %v693 = vadd.f32 %v452, %v655
        %v694 = vadd.f32 %v453, %v658
        %v695 = vadd.f32 %v454, %v663
        %v696 = vadd.f32 %v455, %v666
        %v697 = vadd.f32 %v456, %v671
        %v698 = vadd.f32 %v457, %v674
        %v699 = vadd.f32 %v458, %v679
        %v700 = vadd.f32 %v459, %v682
        %701 = vst [vmem:[#allocation2] sm:$0xff] %v685
        %702 = vst [vmem:[#allocation2 + $0x8] sm:$0xff] %v686
        %703 = vst [vmem:[#allocation2 + $0x10] sm:$0xff] %v687
        %704 = vst [vmem:[#allocation2 + $0x18] sm:$0xff] %v688
        %705 = vst [vmem:[#allocation2 + $0x20] sm:$0xff] %v689
        %706 = vst [vmem:[#allocation2 + $0x28] sm:$0xff] %v690
        %707 = vst [vmem:[#allocation2 + $0x30] sm:$0xff] %v691
        %708 = vst [vmem:[#allocation2 + $0x38] sm:$0xff] %v692
        %709 = vst [vmem:[#allocation2 + $0x40] sm:$0xff] %v693
        %710 = vst [vmem:[#allocation2 + $0x48] sm:$0xff] %v694
        %711 = vst [vmem:[#allocation2 + $0x50] sm:$0xff] %v695
        %712 = vst [vmem:[#allocation2 + $0x58] sm:$0xff] %v696
        %713 = vst [vmem:[#allocation2 + $0x60] sm:$0xff] %v697
        %714 = vst [vmem:[#allocation2 + $0x68] sm:$0xff] %v698
        %715 = vst [vmem:[#allocation2 + $0x70] sm:$0xff] %v699
        %716 = vst [vmem:[#allocation2 + $0x78] sm:$0xff] %v700
        %p717 = scmp.eq.s32.totalorder %s33, 1
        // Predicated region
        $region73: #{tpu_custom_call.1} parent=47 // pred_check
          %p718 = pneg %p717
        $region74: #{tpu_custom_call.1} parent=47 // pred_check_branch
          %720 = sbr.rel (%p718) target = $region76
        $region75: #{tpu_custom_call.1} parent=47 // pred_region
          %v721 = vld [vmem:[%s370] sm:$0xff]
          %v722 = vld [vmem:[%s370 + $0x8] sm:$0xff]
          %v723 = vld [vmem:[%s370 + $0x10] sm:$0xff]
          %v724 = vld [vmem:[%s370 + $0x18] sm:$0xff]
          %v725 = vld [vmem:[%s370 + $0x20] sm:$0xff]
          %v726 = vld [vmem:[%s370 + $0x28] sm:$0xff]
          %v727 = vld [vmem:[%s370 + $0x30] sm:$0xff]
          %v728 = vld [vmem:[%s370 + $0x38] sm:$0xff]
          %v729 = vld [vmem:[%s370 + $0x40] sm:$0xff]
          %v730 = vld [vmem:[%s370 + $0x48] sm:$0xff]
          %v731 = vld [vmem:[%s370 + $0x50] sm:$0xff]
          %v732 = vld [vmem:[%s370 + $0x58] sm:$0xff]
          %v733 = vld [vmem:[%s370 + $0x60] sm:$0xff]
          %v734 = vld [vmem:[%s370 + $0x68] sm:$0xff]
          %v735 = vld [vmem:[%s370 + $0x70] sm:$0xff]
          %v736 = vld [vmem:[%s370 + $0x78] sm:$0xff]
          %v737 = vld [vmem:[#allocation2] sm:$0xff]
          %v738 = vld [vmem:[#allocation2 + $0x8] sm:$0xff]
          %v739 = vld [vmem:[#allocation2 + $0x10] sm:$0xff]
          %v740 = vld [vmem:[#allocation2 + $0x18] sm:$0xff]
          %v741 = vld [vmem:[#allocation2 + $0x20] sm:$0xff]
          %v742 = vld [vmem:[#allocation2 + $0x28] sm:$0xff]
          %v743 = vld [vmem:[#allocation2 + $0x30] sm:$0xff]
          %v744 = vld [vmem:[#allocation2 + $0x38] sm:$0xff]
          %v745 = vld [vmem:[#allocation2 + $0x40] sm:$0xff]
          %v746 = vld [vmem:[#allocation2 + $0x48] sm:$0xff]
          %v747 = vld [vmem:[#allocation2 + $0x50] sm:$0xff]
          %v748 = vld [vmem:[#allocation2 + $0x58] sm:$0xff]
          %v749 = vld [vmem:[#allocation2 + $0x60] sm:$0xff]
          %v750 = vld [vmem:[#allocation2 + $0x68] sm:$0xff]
          %v751 = vld [vmem:[#allocation2 + $0x70] sm:$0xff]
          %v752 = vld [vmem:[#allocation2 + $0x78] sm:$0xff]
          %v753 = vadd.f32 %v721, %v737
          %v754 = vadd.f32 %v722, %v738
          %v755 = vadd.f32 %v723, %v739
          %v756 = vadd.f32 %v724, %v740
          %v757 = vadd.f32 %v725, %v741
          %v758 = vadd.f32 %v726, %v742
          %v759 = vadd.f32 %v727, %v743
          %v760 = vadd.f32 %v728, %v744
          %v761 = vadd.f32 %v729, %v745
          %v762 = vadd.f32 %v730, %v746
          %v763 = vadd.f32 %v731, %v747
          %v764 = vadd.f32 %v732, %v748
          %v765 = vadd.f32 %v733, %v749
          %v766 = vadd.f32 %v734, %v750
          %v767 = vadd.f32 %v735, %v751
          %v768 = vadd.f32 %v736, %v752
          %v769 = vpack.c.bf16 %v754, %v753
          %v770 = vpack.c.bf16 %v756, %v755
          %v771 = vpack.c.bf16 %v758, %v757
          %v772 = vpack.c.bf16 %v760, %v759
          %v773 = vpack.c.bf16 %v762, %v761
          %v774 = vpack.c.bf16 %v764, %v763
          %v775 = vpack.c.bf16 %v766, %v765
          %v776 = vpack.c.bf16 %v768, %v767
          %v777 = vld [vmem:[#allocation9] sm:$0xf]
          %v778 = vld [vmem:[#allocation9 + $0x4] sm:$0xf]
          %v779 = vld [vmem:[#allocation9 + $0x8] sm:$0xf]
          %v780 = vld [vmem:[#allocation9 + $0xc] sm:$0xf]
          %v781 = vld [vmem:[#allocation9 + $0x10] sm:$0xf]
          %v782 = vld [vmem:[#allocation9 + $0x14] sm:$0xf]
          %v783 = vld [vmem:[#allocation9 + $0x18] sm:$0xf]
          %v784 = vld [vmem:[#allocation9 + $0x1c] sm:$0xf]
          %v785 = vld [vmem:[#allocation9 + $0x20] sm:$0xf]
          %v786 = vld [vmem:[#allocation9 + $0x24] sm:$0xf]
          %v787 = vld [vmem:[#allocation9 + $0x28] sm:$0xf]
          %v788 = vld [vmem:[#allocation9 + $0x2c] sm:$0xf]
          %v789 = vld [vmem:[#allocation9 + $0x30] sm:$0xf]
          %v790 = vld [vmem:[#allocation9 + $0x34] sm:$0xf]
          %v791 = vld [vmem:[#allocation9 + $0x38] sm:$0xf]
          %v792 = vld [vmem:[#allocation9 + $0x3c] sm:$0xf]
          %v793 = vld [vmem:[%s4] sm:$0x1]
          %v795 = vlaneseq
          %v796 = vshrl.u32 %v795, 7
          %v797 = vsub.s32 0, %v796
          %v798 = vrot.slane %v793, %v797
          %v816 = vunpack.c.l.b16 %v777
          %v817 = vunpack.c.l.b16 %v778
          %v818 = vunpack.c.l.b16 %v779
          %v819 = vunpack.c.l.b16 %v780
          %v820 = vunpack.c.l.b16 %v781
          %v821 = vunpack.c.l.b16 %v782
          %v822 = vunpack.c.l.b16 %v783
          %v823 = vunpack.c.l.b16 %v784
          %v824 = vunpack.c.l.b16 %v785
          %v825 = vunpack.c.l.b16 %v786
          %v826 = vunpack.c.l.b16 %v787
          %v827 = vunpack.c.l.b16 %v788
          %v828 = vunpack.c.l.b16 %v789
          %v829 = vunpack.c.l.b16 %v790
          %v830 = vunpack.c.l.b16 %v791
          %v831 = vunpack.c.l.b16 %v792
          %v832 = vpack.c.b16 %v817, %v816
          %v833 = vpack.c.b16 %v819, %v818
          %v834 = vpack.c.b16 %v821, %v820
          %v835 = vpack.c.b16 %v823, %v822
          %v836 = vpack.c.b16 %v825, %v824
          %v837 = vpack.c.b16 %v827, %v826
          %v838 = vpack.c.b16 %v829, %v828
          %v839 = vpack.c.b16 %v831, %v830
          %848 = vmatprep.subr.bf16.mxu0 0
          %849 = vmatpush1.bf16.msra.mxu0 %v832
          %850 = vmatprep.subr.bf16.mxu0 0
          %851 = vmatpush1.bf16.msra.mxu0 %v833
          %852 = vmatprep.subr.bf16.mxu0 0
          %853 = vmatpush1.bf16.msra.mxu0 %v834
          %854 = vmatprep.subr.bf16.mxu0 0
          %855 = vmatpush1.bf16.msra.mxu0 %v835
          %856 = vmatprep.subr.bf16.mxu0 0
          %857 = vmatpush1.bf16.msra.mxu0 %v836
          %858 = vmatprep.subr.bf16.mxu0 0
          %859 = vmatpush1.bf16.msra.mxu0 %v837
          %860 = vmatprep.subr.bf16.mxu0 0
          %861 = vmatpush1.bf16.msra.mxu0 %v838
          %862 = vmatprep.subr.bf16.mxu0 0
          %863 = vmatpush1.bf16.msra.mxu0 %v839
          %864 = vmatprep.subr.bf16.mxu0 0
          %865 = vmatpush1.bf16.msra.mxu0 0
          %866 = vmatprep.subr.bf16.mxu0 0
          %867 = vmatpush1.bf16.msra.mxu0 0
          %868 = vmatprep.subr.bf16.mxu0 0
          %869 = vmatpush1.bf16.msra.mxu0 0
          %870 = vmatprep.subr.bf16.mxu0 0
          %871 = vmatpush1.bf16.msra.mxu0 0
          %872 = vmatprep.subr.bf16.mxu0 0
          %873 = vmatpush1.bf16.msra.mxu0 0
          %874 = vmatprep.subr.bf16.mxu0 0
          %875 = vmatpush1.bf16.msra.mxu0 0
          %876 = vmatprep.subr.bf16.mxu0 0
          %877 = vmatpush1.bf16.msra.mxu0 0
          %878 = vmatprep.subr.bf16.mxu0 0
          %879 = vmatpush1.bf16.msra.mxu0 0
          %880 = vmatprep.mubr.bf16.mxu0 0
          %881 = vmatmul.mubr.bf16.gmra.mrb[0].mxu0 %v769
          %v882 = vpop.f32.mrb[0].mxu0
          %v883 = vadd.f32 %v798, %v882
          %v884 = vpop.f32.mrb[0].mxu0
          %v885 = vpop.f32.mrb[0].mxu0
          %v886 = vadd.f32 %v798, %v885
          %v887 = vpop.f32.mrb[0].mxu0
          %888 = vmatprep.mubr.bf16.mxu0 0
          %889 = vmatmul.mubr.bf16.gmra.mrb[0].mxu0 %v770
          %v890 = vpop.f32.mrb[0].mxu0
          %v891 = vadd.f32 %v798, %v890
          %v892 = vpop.f32.mrb[0].mxu0
          %v893 = vpop.f32.mrb[0].mxu0
          %v894 = vadd.f32 %v798, %v893
          %v895 = vpop.f32.mrb[0].mxu0
          %896 = vmatprep.mubr.bf16.mxu0 0
          %897 = vmatmul.mubr.bf16.gmra.mrb[0].mxu0 %v771
          %v898 = vpop.f32.mrb[0].mxu0
          %v899 = vadd.f32 %v798, %v898
          %v900 = vpop.f32.mrb[0].mxu0
          %v901 = vpop.f32.mrb[0].mxu0
          %v902 = vadd.f32 %v798, %v901
          %v903 = vpop.f32.mrb[0].mxu0
          %904 = vmatprep.mubr.bf16.mxu0 0
          %905 = vmatmul.mubr.bf16.gmra.mrb[0].mxu0 %v772
          %v906 = vpop.f32.mrb[0].mxu0
          %v907 = vadd.f32 %v798, %v906
          %v908 = vpop.f32.mrb[0].mxu0
          %v909 = vpop.f32.mrb[0].mxu0
          %v910 = vadd.f32 %v798, %v909
          %v911 = vpop.f32.mrb[0].mxu0
          %912 = vmatprep.mubr.bf16.mxu0 0
          %913 = vmatmul.mubr.bf16.gmra.mrb[0].mxu0 %v773
          %v914 = vpop.f32.mrb[0].mxu0
          %v915 = vadd.f32 %v798, %v914
          %v916 = vpop.f32.mrb[0].mxu0
          %v917 = vpop.f32.mrb[0].mxu0
          %v918 = vadd.f32 %v798, %v917
          %v919 = vpop.f32.mrb[0].mxu0
          %920 = vmatprep.mubr.bf16.mxu0 0
          %921 = vmatmul.mubr.bf16.gmra.mrb[0].mxu0 %v774
          %v922 = vpop.f32.mrb[0].mxu0
          %v923 = vadd.f32 %v798, %v922
          %v924 = vpop.f32.mrb[0].mxu0
          %v925 = vpop.f32.mrb[0].mxu0
          %v926 = vadd.f32 %v798, %v925
          %v927 = vpop.f32.mrb[0].mxu0
          %928 = vmatprep.mubr.bf16.mxu0 0
          %929 = vmatmul.mubr.bf16.gmra.mrb[0].mxu0 %v775
          %v930 = vpop.f32.mrb[0].mxu0
          %v931 = vadd.f32 %v798, %v930
          %v932 = vpop.f32.mrb[0].mxu0
          %v933 = vpop.f32.mrb[0].mxu0
          %v934 = vadd.f32 %v798, %v933
          %v935 = vpop.f32.mrb[0].mxu0
          %936 = vmatprep.mubr.bf16.mxu0 0
          %937 = vmatmul.mubr.bf16.gmra.mrb[0].mxu0 %v776
          %v938 = vpop.f32.mrb[0].mxu0
          %v939 = vadd.f32 %v798, %v938
          %v940 = vpop.f32.mrb[0].mxu0
          %v941 = vpop.f32.mrb[0].mxu0
          %v942 = vadd.f32 %v798, %v941
          %v943 = vpop.f32.mrb[0].mxu0
          %944 = vdwg.mxu0
          %v945 = vmax.f32 %v883, 0.0
          %v946 = vmax.f32 %v886, 0.0
          %v947 = vmax.f32 %v891, 0.0
          %v948 = vmax.f32 %v894, 0.0
          %v949 = vmax.f32 %v899, 0.0
          %v950 = vmax.f32 %v902, 0.0
          %v951 = vmax.f32 %v907, 0.0
          %v952 = vmax.f32 %v910, 0.0
          %v953 = vmax.f32 %v915, 0.0
          %v954 = vmax.f32 %v918, 0.0
          %v955 = vmax.f32 %v923, 0.0
          %v956 = vmax.f32 %v926, 0.0
          %v957 = vmax.f32 %v931, 0.0
          %v958 = vmax.f32 %v934, 0.0
          %v959 = vmax.f32 %v939, 0.0
          %v960 = vmax.f32 %v942, 0.0
          %v961 = vpack.c.bf16 %v946, %v945
          %v962 = vpack.c.bf16 %v948, %v947
          %v963 = vpack.c.bf16 %v950, %v949
          %v964 = vpack.c.bf16 %v952, %v951
          %v965 = vpack.c.bf16 %v954, %v953
          %v966 = vpack.c.bf16 %v956, %v955
          %v967 = vpack.c.bf16 %v958, %v957
          %v968 = vpack.c.bf16 %v960, %v959
          %v969 = vld [vmem:[#allocation11] sm:$0xf]
          %v970 = vld [vmem:[#allocation11 + $0x4] sm:$0xf]
          %v971 = vld [vmem:[#allocation11 + $0x8] sm:$0xf]
          %v972 = vld [vmem:[#allocation11 + $0xc] sm:$0xf]
          %v973 = vld [vmem:[#allocation11 + $0x10] sm:$0xf]
          %v974 = vld [vmem:[#allocation11 + $0x14] sm:$0xf]
          %v975 = vld [vmem:[#allocation11 + $0x18] sm:$0xf]
          %v976 = vld [vmem:[#allocation11 + $0x1c] sm:$0xf]
          %v977 = vld [vmem:[#allocation11 + $0x20] sm:$0xf]
          %v978 = vld [vmem:[#allocation11 + $0x24] sm:$0xf]
          %v979 = vld [vmem:[#allocation11 + $0x28] sm:$0xf]
          %v980 = vld [vmem:[#allocation11 + $0x2c] sm:$0xf]
          %v981 = vld [vmem:[#allocation11 + $0x30] sm:$0xf]
          %v982 = vld [vmem:[#allocation11 + $0x34] sm:$0xf]
          %v983 = vld [vmem:[#allocation11 + $0x38] sm:$0xf]
          %v984 = vld [vmem:[#allocation11 + $0x3c] sm:$0xf]
          %v985 = vld [vmem:[%s6] sm:$0x1]
          %v987 = vlaneseq
          %v988 = vshrl.u32 %v987, 7
          %v989 = vsub.s32 0, %v988
          %v990 = vrot.slane %v985, %v989
          %v1008 = vunpack.c.l.b16 %v969
          %v1009 = vunpack.c.l.b16 %v970
          %v1010 = vunpack.c.l.b16 %v971
          %v1011 = vunpack.c.l.b16 %v972
          %v1012 = vunpack.c.l.b16 %v973
          %v1013 = vunpack.c.l.b16 %v974
          %v1014 = vunpack.c.l.b16 %v975
          %v1015 = vunpack.c.l.b16 %v976
          %v1016 = vunpack.c.l.b16 %v977
          %v1017 = vunpack.c.l.b16 %v978
          %v1018 = vunpack.c.l.b16 %v979
          %v1019 = vunpack.c.l.b16 %v980
          %v1020 = vunpack.c.l.b16 %v981
          %v1021 = vunpack.c.l.b16 %v982
          %v1022 = vunpack.c.l.b16 %v983
          %v1023 = vunpack.c.l.b16 %v984
          %v1024 = vpack.c.b16 %v1009, %v1008
          %v1025 = vpack.c.b16 %v1011, %v1010
          %v1026 = vpack.c.b16 %v1013, %v1012
          %v1027 = vpack.c.b16 %v1015, %v1014
          %v1028 = vpack.c.b16 %v1017, %v1016
          %v1029 = vpack.c.b16 %v1019, %v1018
          %v1030 = vpack.c.b16 %v1021, %v1020
          %v1031 = vpack.c.b16 %v1023, %v1022
          %1040 = vmatprep.subr.bf16.mxu0 0
          %1041 = vmatpush1.bf16.msra.mxu0 %v1024
          %1042 = vmatprep.subr.bf16.mxu0 0
          %1043 = vmatpush1.bf16.msra.mxu0 %v1025
          %1044 = vmatprep.subr.bf16.mxu0 0
          %1045 = vmatpush1.bf16.msra.mxu0 %v1026
          %1046 = vmatprep.subr.bf16.mxu0 0
          %1047 = vmatpush1.bf16.msra.mxu0 %v1027
          %1048 = vmatprep.subr.bf16.mxu0 0
          %1049 = vmatpush1.bf16.msra.mxu0 %v1028
          %1050 = vmatprep.subr.bf16.mxu0 0
          %1051 = vmatpush1.bf16.msra.mxu0 %v1029
          %1052 = vmatprep.subr.bf16.mxu0 0
          %1053 = vmatpush1.bf16.msra.mxu0 %v1030
          %1054 = vmatprep.subr.bf16.mxu0 0
          %1055 = vmatpush1.bf16.msra.mxu0 %v1031
          %1056 = vmatprep.subr.bf16.mxu0 0
          %1057 = vmatpush1.bf16.msra.mxu0 0
          %1058 = vmatprep.subr.bf16.mxu0 0
          %1059 = vmatpush1.bf16.msra.mxu0 0
          %1060 = vmatprep.subr.bf16.mxu0 0
          %1061 = vmatpush1.bf16.msra.mxu0 0
          %1062 = vmatprep.subr.bf16.mxu0 0
          %1063 = vmatpush1.bf16.msra.mxu0 0
          %1064 = vmatprep.subr.bf16.mxu0 0
          %1065 = vmatpush1.bf16.msra.mxu0 0
          %1066 = vmatprep.subr.bf16.mxu0 0
          %1067 = vmatpush1.bf16.msra.mxu0 0
          %1068 = vmatprep.subr.bf16.mxu0 0
          %1069 = vmatpush1.bf16.msra.mxu0 0
          %1070 = vmatprep.subr.bf16.mxu0 0
          %1071 = vmatpush1.bf16.msra.mxu0 0
          %1072 = vmatprep.mubr.bf16.mxu0 0
          %1073 = vmatmul.mubr.bf16.gmra.mrb[0].mxu0 %v961
          %v1074 = vpop.f32.mrb[0].mxu0
          %v1075 = vadd.f32 %v990, %v1074
          %v1076 = vpop.f32.mrb[0].mxu0
          %v1077 = vpop.f32.mrb[0].mxu0
          %v1078 = vadd.f32 %v990, %v1077
          %v1079 = vpop.f32.mrb[0].mxu0
          %1080 = vmatprep.mubr.bf16.mxu0 0
          %1081 = vmatmul.mubr.bf16.gmra.mrb[0].mxu0 %v962
          %v1082 = vpop.f32.mrb[0].mxu0
          %v1083 = vadd.f32 %v990, %v1082
          %v1084 = vpop.f32.mrb[0].mxu0
          %v1085 = vpop.f32.mrb[0].mxu0
          %v1086 = vadd.f32 %v990, %v1085
          %v1087 = vpop.f32.mrb[0].mxu0
          %1088 = vmatprep.mubr.bf16.mxu0 0
          %1089 = vmatmul.mubr.bf16.gmra.mrb[0].mxu0 %v963
          %v1090 = vpop.f32.mrb[0].mxu0
          %v1091 = vadd.f32 %v990, %v1090
          %v1092 = vpop.f32.mrb[0].mxu0
          %v1093 = vpop.f32.mrb[0].mxu0
          %v1094 = vadd.f32 %v990, %v1093
          %v1095 = vpop.f32.mrb[0].mxu0
          %1096 = vmatprep.mubr.bf16.mxu0 0
          %1097 = vmatmul.mubr.bf16.gmra.mrb[0].mxu0 %v964
          %v1098 = vpop.f32.mrb[0].mxu0
          %v1099 = vadd.f32 %v990, %v1098
          %v1100 = vpop.f32.mrb[0].mxu0
          %v1101 = vpop.f32.mrb[0].mxu0
          %v1102 = vadd.f32 %v990, %v1101
          %v1103 = vpop.f32.mrb[0].mxu0
          %1104 = vmatprep.mubr.bf16.mxu0 0
          %1105 = vmatmul.mubr.bf16.gmra.mrb[0].mxu0 %v965
          %v1106 = vpop.f32.mrb[0].mxu0
          %v1107 = vadd.f32 %v990, %v1106
          %v1108 = vpop.f32.mrb[0].mxu0
          %v1109 = vpop.f32.mrb[0].mxu0
          %v1110 = vadd.f32 %v990, %v1109
          %v1111 = vpop.f32.mrb[0].mxu0
          %1112 = vmatprep.mubr.bf16.mxu0 0
          %1113 = vmatmul.mubr.bf16.gmra.mrb[0].mxu0 %v966
          %v1114 = vpop.f32.mrb[0].mxu0
          %v1115 = vadd.f32 %v990, %v1114
          %v1116 = vpop.f32.mrb[0].mxu0
          %v1117 = vpop.f32.mrb[0].mxu0
          %v1118 = vadd.f32 %v990, %v1117
          %v1119 = vpop.f32.mrb[0].mxu0
          %1120 = vmatprep.mubr.bf16.mxu0 0
          %1121 = vmatmul.mubr.bf16.gmra.mrb[0].mxu0 %v967
          %v1122 = vpop.f32.mrb[0].mxu0
          %v1123 = vadd.f32 %v990, %v1122
          %v1124 = vpop.f32.mrb[0].mxu0
          %v1125 = vpop.f32.mrb[0].mxu0
          %v1126 = vadd.f32 %v990, %v1125
          %v1127 = vpop.f32.mrb[0].mxu0
          %1128 = vmatprep.mubr.bf16.mxu0 0
          %1129 = vmatmul.mubr.bf16.gmra.mrb[0].mxu0 %v968
          %v1130 = vpop.f32.mrb[0].mxu0
          %v1131 = vadd.f32 %v990, %v1130
          %v1132 = vpop.f32.mrb[0].mxu0
          %v1133 = vpop.f32.mrb[0].mxu0
          %v1134 = vadd.f32 %v990, %v1133
          %v1135 = vpop.f32.mrb[0].mxu0
          %1136 = vdwg.mxu0
          %1137 = vst [vmem:[%s418] sm:$0xff] %v1075
          %1138 = vst [vmem:[%s418 + $0x8] sm:$0xff] %v1078
          %1139 = vst [vmem:[%s418 + $0x10] sm:$0xff] %v1083
          %1140 = vst [vmem:[%s418 + $0x18] sm:$0xff] %v1086
          %1141 = vst [vmem:[%s418 + $0x20] sm:$0xff] %v1091
          %1142 = vst [vmem:[%s418 + $0x28] sm:$0xff] %v1094
          %1143 = vst [vmem:[%s418 + $0x30] sm:$0xff] %v1099
          %1144 = vst [vmem:[%s418 + $0x38] sm:$0xff] %v1102
          %1145 = vst [vmem:[%s418 + $0x40] sm:$0xff] %v1107
          %1146 = vst [vmem:[%s418 + $0x48] sm:$0xff] %v1110
          %1147 = vst [vmem:[%s418 + $0x50] sm:$0xff] %v1115
          %1148 = vst [vmem:[%s418 + $0x58] sm:$0xff] %v1118
          %1149 = vst [vmem:[%s418 + $0x60] sm:$0xff] %v1123
          %1150 = vst [vmem:[%s418 + $0x68] sm:$0xff] %v1126
          %1151 = vst [vmem:[%s418 + $0x70] sm:$0xff] %v1131
          %1152 = vst [vmem:[%s418 + $0x78] sm:$0xff] %v1134
        $region76: #{tpu_custom_call.1} parent=47 // pred_fallthru
          _
        %s1153 = sand.u32 %s212, 1
        %s1154 = scalar_lea.sflag [#allocation5], %s1153
        %s1155 = sand.u32 %s212, 1
        %s1156 = smul.addr %s1155, 128
        %s1157 = scalar_lea.vmem [#allocation12], %s1156
        // Predicated region
        $region77: #{tpu_custom_call.1} parent=47 // pred_check
          %p1158 = pneg %p222
        $region78: #{tpu_custom_call.1} parent=47 // pred_check_branch
          %1160 = sbr.rel (%p1158) target = $region80
        $region79: #{tpu_custom_call.1} parent=47 // pred_region
          %s1161 = smul.u32 16, %s32
          %s1163 = ssub.s32 2048, 2048
          %1164 = vsyncadd %s1154, %s1163
          %s1165 = smul.addr %s1161, 128
          %s1166 = scalar_lea.hbm %s7, %s1165
          %s1167 = sshll.u32 %s1157, 4
          %s1168 = int_to_ptr.vmem [resolvable:$true] %s1167
          %1173 = dma.vmem_to_hbm [thread:$0]  %s1168, 2048, %s1166, %s1154, 128, 128, 8
        $region80: #{tpu_custom_call.1} parent=47 // pred_fallthru
          _
      $region48: #{tpu_custom_call.1} parent=5 // pred_fallthru
        _
      %p1174 = scmp.le.s32.totalorder 2, %s23
      // Predicated region
      $region81: #{tpu_custom_call.1} parent=5 // pred_check
        %p1175 = pneg %p1174
      $region82: #{tpu_custom_call.1} parent=5 // pred_check_branch
        %1177 = sbr.rel (%p1175) target = $region84
      $region83: #{tpu_custom_call.1} parent=5 // pred_region
        %s1178 = ssub.s32 %s23, 2
        // Predicated region
        $region85: #{tpu_custom_call.1} parent=83 // pred_check
          %p1179 = pneg %p228
        $region86: #{tpu_custom_call.1} parent=83 // pred_check_branch
          %1181 = sbr.rel (%p1179) target = $region88
        $region87: #{tpu_custom_call.1} parent=83 // pred_region
          %s1182 = sand.u32 %s213, 1
          %s1183 = scalar_lea.sflag [#allocation5], %s1182
          %s1184 = sand.u32 %s213, 1
          %s1185 = smul.addr %s1184, 128
          %s1186 = scalar_lea.vmem [#allocation12], %s1185
          %1187 = dma.done %s1183, 2048
        $region88: #{tpu_custom_call.1} parent=83 // pred_fallthru
          _
      $region84: #{tpu_custom_call.1} parent=5 // pred_fallthru
        _
    $region6: #{tpu_custom_call.1} parent=1 // loop_footer
      %s27 = sadd.s32 1, %s23
    $region7: #{tpu_custom_call.1} parent=1 // loop_footer_branch
      %22 = sbr.rel target = $region3
    $region8: #{tpu_custom_call.1} parent=1 // loop_exit
      _
    %1188 = vsyncpa [#allocation4], 1
    %s1189 = scalar_lea.sflag [#allocation4], 1
    %1190 = vsyncpa %s1189, 1
    %1191 = vsyncpa [#allocation7], 1
    %s1192 = scalar_lea.sflag [#allocation7], 1
    %1193 = vsyncpa %s1192, 1
    %1194 = vsyncpa [#allocation10], 1
    %1195 = vsyncpa [#allocation5], 1
    %s1196 = scalar_lea.sflag [#allocation5], 1
    %1197 = vsyncpa %s1196, 1

</llo_original>
